<compile_context>
chip_gen: v6e
topology: v6e:2x2x1
jax: 0.10.0
libtpu: 0.0.40
codegen_flags: <defaults>
</compile_context>

<pallas_src>
import jax
import jax.numpy as jnp
from jax.experimental import pallas as pl
from jax.experimental.pallas import tpu as pltpu

HIDDEN_PAD = 64  # padded hidden width (true hidden width = 50)


def _round_up(n, m):
    return (n + m - 1) // m * m


def _choose_tile_b(B, tile_b_max):
    """Pick a lane-aligned batch tile: multiple of 128, capped at the request,
    and small enough that num_tiles >= 2 when there is work for two cores."""
    tb = _round_up(min(max(tile_b_max, 128), _round_up(B, 128)), 128)
    if B > 128 and -(-B // tb) < 2:          # v7x megacore hygiene
        tb = _round_up(-(-B // 2), 128)
    return max(tb, 128)


def mlp_kernel(xt_ref, w_ref, b_ref, w3_ref, b3_ref, o_ref):
    """All refs are f32.  Per-grid-step shapes:
        xt_ref : (2, TB)   input features, batch on lanes
        w_ref  : (H, 2)    folded W_eff = W2 @ W1   (zero-padded rows 50..H-1)
        b_ref  : (H, 1)    folded b_eff = W2 @ b1 + b2
        w3_ref : (H, 1)    layer_3 weight (column)
        b3_ref : (1, 1)    layer_3 bias
        o_ref  : (1, TB)   lane-dense logits row for this batch tile
    Matches the PyTorch forward layer_3(relu(layer_2(layer_1(x)))); layers 1+2
    are algebraically folded since there is no activation between them.
    """
    xt = xt_ref[...]                                      # (2, TB)
    w = w_ref[...]                                        # (H, 2)

    # Folded layer_1+layer_2 as two VPU broadcast multiply-adds (no MXU),
    # then bias + ReLU.  Padded rows are exactly zero -> relu(0) = 0.
    h = jnp.maximum(
        w[:, 0:1] * xt[0:1, :] + w[:, 1:2] * xt[1:2, :] + b_ref[...], 0.0)

    # layer_3 (N=1) as broadcast-multiply + sublane reduction -> (1, TB).
    out = jnp.sum(h * w3_ref[...], axis=0, keepdims=True) + b3_ref[...]

    o_ref[...] = out.astype(o_ref.dtype)


def circle_model_v0(x, kp, *, tile_b=4096):
    """Forward pass. x: (B, 2) f32. kp: folded/padded params from
    prepare_params(). Returns (B, 1) f32 logits."""
    B = x.shape[0]
    H = kp["w"].shape[0]

    tb = _choose_tile_b(B, tile_b)
    num_tiles = -(-B // tb)

    # Only a transpose outside the kernel (no materialized zero-pad copy);
    # Pallas handles the partial last block.
    xt = x.astype(jnp.float32).T                          # (2, B)

    grid_spec = pltpu.PrefetchScalarGridSpec(
        num_scalar_prefetch=0,
        grid=(num_tiles,),
        in_specs=[
            pl.BlockSpec((2, tb), lambda i: (0, i)),      # x tile (streamed)
            pl.BlockSpec((H, 2), lambda i: (0, 0)),       # weights stay resident
            pl.BlockSpec((H, 1), lambda i: (0, 0)),
            pl.BlockSpec((H, 1), lambda i: (0, 0)),
            pl.BlockSpec((1, 1), lambda i: (0, 0)),
        ],
        out_specs=pl.BlockSpec((1, tb), lambda i: (0, i)),
    )

    # Effective (folded) arithmetic: (2->50) + (50->1) per sample.
    flops = 2 * B * (2 * 50 + 50)
    bytes_accessed = B * (2 + 1) * 4 + sum(int(v.size) * 4 for v in kp.values())

    out = pl.pallas_call(
        mlp_kernel,
        out_shape=jax.ShapeDtypeStruct((1, B), jnp.float32),
        grid_spec=grid_spec,
        compiler_params=pltpu.CompilerParams(
            dimension_semantics=("parallel",)),
        cost_estimate=pl.CostEstimate(
            flops=int(flops), transcendentals=0,
            bytes_accessed=int(bytes_accessed)),
    )(xt, kp["w"], kp["b"], kp["w3"], kp["b3"])

    return out.reshape(B, 1)


def init_params(key):
    """PyTorch-layout params (W: (out, in), b: (out,)), mimicking nn.Linear's
    U(-1/sqrt(fan_in), 1/sqrt(fan_in)) init."""
    def linear(k, fan_in, fan_out):
        kw, kb = jax.random.split(k)
        bound = 1.0 / float(fan_in) ** 0.5
        w = jax.random.uniform(kw, (fan_out, fan_in), jnp.float32, -bound, bound)
        b = jax.random.uniform(kb, (fan_out,), jnp.float32, -bound, bound)
        return w, b

    k1, k2, k3 = jax.random.split(key, 3)
    W1, b1 = linear(k1, 2, 50)
    W2, b2 = linear(k2, 50, 50)
    W3, b3 = linear(k3, 50, 1)
    return dict(W1=W1, b1=b1, W2=W2, b2=b2, W3=W3, b3=b3)


def prepare_params(p, hidden_pad=HIDDEN_PAD):
    """Fold layer_1 into layer_2 (no nonlinearity between them) and zero-pad
    the hidden width to `hidden_pad` for the transposed (feature-on-sublane,
    batch-on-lane) kernel.  Padding rows are exactly zero, so padded
    activations stay zero through ReLU/layer_3."""
    hp = jax.lax.Precision.HIGHEST
    W_eff = jnp.dot(p["W2"], p["W1"], precision=hp)               # (50, 2)
    b_eff = jnp.dot(p["W2"], p["b1"], precision=hp) + p["b2"]     # (50,)

    H = hidden_pad
    h = W_eff.shape[0]
    w = jnp.zeros((H, 2), jnp.float32).at[:h, :].set(W_eff)
    b = jnp.zeros((H, 1), jnp.float32).at[:h, 0].set(b_eff)
    w3 = jnp.zeros((H, 1), jnp.float32).at[:h, 0].set(p["W3"][0, :])
    b3 = p["b3"].reshape(1, 1).astype(jnp.float32)
    return dict(w=w, b=b, w3=w3, b3=b3)


def reference(x, p):
    hp = jax.lax.Precision.HIGHEST
    h1 = jnp.dot(x, p["W1"].T, precision=hp) + p["b1"]
    h2 = jnp.maximum(jnp.dot(h1, p["W2"].T, precision=hp) + p["b2"], 0.0)
    return jnp.dot(h2, p["W3"].T, precision=hp) + p["b3"]


if __name__ == "__main__":
    key = jax.random.PRNGKey(0)
    kx, kparam = jax.random.split(key)

    params = init_params(kparam)       # PyTorch-shaped
    kparams = prepare_params(params)   # folded / padded kernel layout

    # Small single-(partial-)tile case and a multi-tile case.
    for B, tile_b in ((8, 4096), (256, 128)):
        x = jax.random.normal(jax.random.fold_in(kx, B), (B, 2),
                              dtype=jnp.float32)
        logits = circle_model_v0(x, kparams, tile_b=tile_b)
        jax.block_until_ready(logits)
        ref = reference(x, params)
        assert logits.shape == (B, 1), logits.shape
        assert jnp.allclose(logits, ref, atol=1e-4, rtol=1e-4), (
            float(jnp.max(jnp.abs(logits - ref))))

    # TODO(synk): training_loop / accuracy_fn (BCE loss, SGD) are host-side
    # training utilities, intentionally not implemented as kernels.
    print("KERNEL_OK")
</pallas_src>

<mosaic_0001>
module attributes {stable_mosaic.version = 11 : i64} {
  func.func @mlp_kernel(%arg0: i32, %arg1: memref<2x128xf32, #tpu.memory_space<vmem>>, %arg2: memref<64x2xf32, #tpu.memory_space<vmem>>, %arg3: memref<64x1xf32, #tpu.memory_space<vmem>>, %arg4: memref<64x1xf32, #tpu.memory_space<vmem>>, %arg5: memref<1x1xf32, #tpu.memory_space<vmem>>, %arg6: memref<1x128xf32, #tpu.memory_space<vmem>>) attributes {dimension_semantics = [#tpu.dimension_semantics<parallel>], iteration_bounds = array<i64: 1>, scalar_prefetch = 0 : i64, scratch_operands = 0 : i64, tpu.core_type = #tpu.core_type<tc>, window_params = [{transform_indices = @transform_0, window_bounds = array<i64: 2, 128>}, {pipeline_mode = #tpu.pipeline_mode<synchronous>, transform_indices = @transform_1, window_bounds = array<i64: 64, 2>}, {pipeline_mode = #tpu.pipeline_mode<synchronous>, transform_indices = @transform_2, window_bounds = array<i64: 64, 1>}, {pipeline_mode = #tpu.pipeline_mode<synchronous>, transform_indices = @transform_3, window_bounds = array<i64: 64, 1>}, {pipeline_mode = #tpu.pipeline_mode<synchronous>, transform_indices = @transform_4, window_bounds = array<i64: 1, 1>}, {transform_indices = @transform_5, window_bounds = array<i64: 1, 128>}]} {
    %c0 = arith.constant 0 : index
    %c0_0 = arith.constant 0 : index
    %0 = vector.load %arg1[%c0, %c0_0] : memref<2x128xf32, #tpu.memory_space<vmem>>, vector<2x128xf32>
    %c0_1 = arith.constant 0 : index
    %c0_2 = arith.constant 0 : index
    %1 = vector.load %arg2[%c0_1, %c0_2] : memref<64x2xf32, #tpu.memory_space<vmem>>, vector<64x2xf32>
    %2 = vector.extract_strided_slice %1 {offsets = [0, 0], sizes = [64, 1], strides = [1, 1]} : vector<64x2xf32> to vector<64x1xf32>
    %3 = vector.extract_strided_slice %0 {offsets = [0, 0], sizes = [1, 128], strides = [1, 1]} : vector<2x128xf32> to vector<1x128xf32>
    %4 = vector.broadcast %2 : vector<64x1xf32> to vector<64x128xf32>
    %5 = vector.broadcast %3 : vector<1x128xf32> to vector<64x128xf32>
    %6 = arith.mulf %4, %5 : vector<64x128xf32>
    %7 = vector.extract_strided_slice %1 {offsets = [0, 1], sizes = [64, 1], strides = [1, 1]} : vector<64x2xf32> to vector<64x1xf32>
    %8 = vector.extract_strided_slice %0 {offsets = [1, 0], sizes = [1, 128], strides = [1, 1]} : vector<2x128xf32> to vector<1x128xf32>
    %9 = vector.broadcast %7 : vector<64x1xf32> to vector<64x128xf32>
    %10 = vector.broadcast %8 : vector<1x128xf32> to vector<64x128xf32>
    %11 = arith.mulf %9, %10 : vector<64x128xf32>
    %12 = arith.addf %6, %11 : vector<64x128xf32>
    %c0_3 = arith.constant 0 : index
    %c0_4 = arith.constant 0 : index
    %13 = vector.load %arg3[%c0_3, %c0_4] : memref<64x1xf32, #tpu.memory_space<vmem>>, vector<64x1xf32>
    %14 = vector.broadcast %13 : vector<64x1xf32> to vector<64x128xf32>
    %15 = arith.addf %12, %14 : vector<64x128xf32>
    %cst = arith.constant 0.000000e+00 : f32
    %16 = vector.broadcast %cst : f32 to vector<64x128xf32>
    %17 = arith.maximumf %15, %16 : vector<64x128xf32>
    %c0_5 = arith.constant 0 : index
    %c0_6 = arith.constant 0 : index
    %18 = vector.load %arg4[%c0_5, %c0_6] : memref<64x1xf32, #tpu.memory_space<vmem>>, vector<64x1xf32>
    %19 = vector.broadcast %18 : vector<64x1xf32> to vector<64x128xf32>
    %20 = arith.mulf %17, %19 : vector<64x128xf32>
    %cst_7 = arith.constant dense<0.000000e+00> : vector<128xf32>
    %21 = vector.multi_reduction <add>, %20, %cst_7 [0] : vector<64x128xf32> to vector<128xf32>
    %22 = vector.shape_cast %21 : vector<128xf32> to vector<1x128xf32>
    %c0_8 = arith.constant 0 : index
    %c0_9 = arith.constant 0 : index
    %23 = vector.load %arg5[%c0_8, %c0_9] : memref<1x1xf32, #tpu.memory_space<vmem>>, vector<1x1xf32>
    %24 = vector.broadcast %23 : vector<1x1xf32> to vector<1x128xf32>
    %25 = arith.addf %22, %24 : vector<1x128xf32>
    %c0_10 = arith.constant 0 : index
    %c0_11 = arith.constant 0 : index
    %26 = vector.load %arg6[%c0_10, %c0_11] : memref<1x128xf32, #tpu.memory_space<vmem>>, vector<1x128xf32>
    tpu.vector_store %arg6[%c0_10, %c0_11], %25 {strides = array<i32>} : memref<1x128xf32, #tpu.memory_space<vmem>>, vector<1x128xf32>,
    return
  }
  func.func @transform_0(%arg0: i32) -> (i32, i32) {
    %c0_i32 = arith.constant 0 : i32
    %c0_i32_0 = arith.constant 0 : i32
    return %c0_i32, %arg0 : i32, i32
  }
  func.func @transform_1(%arg0: i32) -> (i32, i32) {
    %c0_i32 = arith.constant 0 : i32
    %c0_i32_0 = arith.constant 0 : i32
    %c0_i32_1 = arith.constant 0 : i32
    return %c0_i32, %c0_i32_0 : i32, i32
  }
  func.func @transform_2(%arg0: i32) -> (i32, i32) {
    %c0_i32 = arith.constant 0 : i32
    %c0_i32_0 = arith.constant 0 : i32
    %c0_i32_1 = arith.constant 0 : i32
    return %c0_i32, %c0_i32_0 : i32, i32
  }
  func.func @transform_3(%arg0: i32) -> (i32, i32) {
    %c0_i32 = arith.constant 0 : i32
    %c0_i32_0 = arith.constant 0 : i32
    %c0_i32_1 = arith.constant 0 : i32
    return %c0_i32, %c0_i32_0 : i32, i32
  }
  func.func @transform_4(%arg0: i32) -> (i32, i32) {
    %c0_i32 = arith.constant 0 : i32
    %c0_i32_0 = arith.constant 0 : i32
    %c0_i32_1 = arith.constant 0 : i32
    return %c0_i32, %c0_i32_0 : i32, i32
  }
  func.func @transform_5(%arg0: i32) -> (i32, i32) {
    %c0_i32 = arith.constant 0 : i32
    %c0_i32_0 = arith.constant 0 : i32
    return %c0_i32, %arg0 : i32, i32
  }
}

</mosaic_0001>

<llo_original>
// kernel: tpu_custom_call.1
$region0: #{tpu_custom_call.1}
  #allocation0 [shape = 'u32[]', space=smem, size = 0x4, offset = 0x4, fixed_abs, tag = 'smem constant byte address 0x4 - core index']
  #allocation1 [shape = 'u32[144,128]{1,0:T(1,128)}', space=vmem, size = 0x12000, scoped, tag = 'internal scratch']
  #allocation2 [shape = 'f32[1,1]{1,0:T(1,128)S(1)}', space=vmem, size = 0x200, scoped, tag = 'scoped memory for tpu_custom_call.1']
  %s0 = inlined_call_operand.vmem [shape: f32[2,8], index: 0, kind: input, shape index: {}]
  %s1 = inlined_call_operand.vmem [shape: f32[64,2], index: 1, kind: input, shape index: {}]
  %s2 = inlined_call_operand.vmem [shape: f32[64,1], index: 2, kind: input, shape index: {}]
  %s3 = inlined_call_operand.vmem [shape: f32[64,1], index: 3, kind: input, shape index: {}]
  %s4 = inlined_call_operand.<no memory space> [shape: f32[1,1], index: 4, kind: input, shape index: {}]
  %s5 = inlined_call_operand.hbm [shape: f32[1,8], index: 5, kind: output, shape index: {}]
  %s6 = sld [smem:[#allocation0]]
  $region30: #{tpu_custom_call.1} parent=0
    _
  %s8 = ssub.s32 1, %s6
  %s9 = scalar_select 0, %s8, %s6
  %v10 = vstv %s4
  %11 = vst [vmem:[#allocation2] sm:$0x1] %v10
  $region1: #{tpu_custom_call.1} parent=0
    #allocation3 [shape = 'u8[512]{0}', space=vmem, size = 0x400, scoped, tag = 'output window, operand 0, single buffered']
    #allocation4 [shape = 's32[1]{0}', space=sflag, size = 0x4, scoped, tag = 'scoped memory for tpu_custom_call.1']
    %12 = vsyncpa [#allocation4], 0
    // Predicated region
    $region2: #{tpu_custom_call.1} parent=1 // pred_check
      _
    $region3: #{tpu_custom_call.1} parent=1 // pred_check_branch
      %14 = sbr.rel (0) target = $region5
    $region4: #{tpu_custom_call.1} parent=1 // pred_region
      _
    $region5: #{tpu_custom_call.1} parent=1 // pred_fallthru
      _
    // Predicated region
    $region6: #{tpu_custom_call.1} parent=1 // pred_check
      _
    $region7: #{tpu_custom_call.1} parent=1 // pred_check_branch
      %16 = sbr.rel (0) target = $region9
    $region8: #{tpu_custom_call.1} parent=1 // pred_region
      _
    $region9: #{tpu_custom_call.1} parent=1 // pred_fallthru
      _
    // Predicated region
    $region10: #{tpu_custom_call.1} parent=1 // pred_check
      _
    $region11: #{tpu_custom_call.1} parent=1 // pred_check_branch
      %18 = sbr.rel (0) target = $region13
    $region12: #{tpu_custom_call.1} parent=1 // pred_region
      _
    $region13: #{tpu_custom_call.1} parent=1 // pred_fallthru
      _
    // Predicated region
    $region14: #{tpu_custom_call.1} parent=1 // pred_check
      _
    $region15: #{tpu_custom_call.1} parent=1 // pred_check_branch
      %20 = sbr.rel (0) target = $region17
    $region16: #{tpu_custom_call.1} parent=1 // pred_region
      _
    $region17: #{tpu_custom_call.1} parent=1 // pred_fallthru
      _
    // Predicated region
    $region18: #{tpu_custom_call.1} parent=1 // pred_check
      _
    $region19: #{tpu_custom_call.1} parent=1 // pred_check_branch
      %22 = sbr.rel (0) target = $region21
    $region20: #{tpu_custom_call.1} parent=1 // pred_region
      _
    $region21: #{tpu_custom_call.1} parent=1 // pred_fallthru
      _
    %v23 = vld [vmem:[%s0] sm:$0x3]
    %v24 = vld [vmem:[%s1] sm:$0xff]
    %v25 = vld [vmem:[%s1 + $0x8] sm:$0xff]
    %v26 = vld [vmem:[%s1 + $0x10] sm:$0xff]
    %v27 = vld [vmem:[%s1 + $0x18] sm:$0xff]
    %v28 = vld [vmem:[%s1 + $0x20] sm:$0xff]
    %v29 = vld [vmem:[%s1 + $0x28] sm:$0xff]
    %v30 = vld [vmem:[%s1 + $0x30] sm:$0xff]
    %v31 = vld [vmem:[%s1 + $0x38] sm:$0xff]
    %33 = vset.pattern.permute.xlu0 0
    %34 = vperm.xlu0 %33, %v24
    %v35 = vpop.permute.xlu0 %34
    %38 = vset.pattern.permute.xlu0 0
    %39 = vperm.xlu0 %38, %v25
    %v40 = vpop.permute.xlu0 %39
    %43 = vset.pattern.permute.xlu0 0
    %44 = vperm.xlu0 %43, %v26
    %v45 = vpop.permute.xlu0 %44
    %48 = vset.pattern.permute.xlu0 0
    %49 = vperm.xlu0 %48, %v27
    %v50 = vpop.permute.xlu0 %49
    %53 = vset.pattern.permute.xlu0 0
    %54 = vperm.xlu0 %53, %v28
    %v55 = vpop.permute.xlu0 %54
    %58 = vset.pattern.permute.xlu0 0
    %59 = vperm.xlu0 %58, %v29
    %v60 = vpop.permute.xlu0 %59
    %63 = vset.pattern.permute.xlu0 0
    %64 = vperm.xlu0 %63, %v30
    %v65 = vpop.permute.xlu0 %64
    %68 = vset.pattern.permute.xlu0 0
    %69 = vperm.xlu0 %68, %v31
    %v70 = vpop.permute.xlu0 %69
    %v72 = vlaneseq
    %v73 = vshrl.u32 %v72, 7
    %v74 = vsub.s32 0, %v73
    %v75 = vrot.slane %v23, %v74
    %v76 = vmul.f32 %v35, %v75
    %v77 = vmul.f32 %v40, %v75
    %v78 = vmul.f32 %v45, %v75
    %v79 = vmul.f32 %v50, %v75
    %v80 = vmul.f32 %v55, %v75
    %v81 = vmul.f32 %v60, %v75
    %v82 = vmul.f32 %v65, %v75
    %v83 = vmul.f32 %v70, %v75
    %84 = vset.pattern.permute.xlu0 1
    %85 = vperm.xlu0 %84, %v24
    %v86 = vpop.permute.xlu0 %85
    %88 = vset.pattern.permute.xlu0 1
    %89 = vperm.xlu0 %88, %v25
    %v90 = vpop.permute.xlu0 %89
    %92 = vset.pattern.permute.xlu0 1
    %93 = vperm.xlu0 %92, %v26
    %v94 = vpop.permute.xlu0 %93
    %96 = vset.pattern.permute.xlu0 1
    %97 = vperm.xlu0 %96, %v27
    %v98 = vpop.permute.xlu0 %97
    %100 = vset.pattern.permute.xlu0 1
    %101 = vperm.xlu0 %100, %v28
    %v102 = vpop.permute.xlu0 %101
    %104 = vset.pattern.permute.xlu0 1
    %105 = vperm.xlu0 %104, %v29
    %v106 = vpop.permute.xlu0 %105
    %108 = vset.pattern.permute.xlu0 1
    %109 = vperm.xlu0 %108, %v30
    %v110 = vpop.permute.xlu0 %109
    %112 = vset.pattern.permute.xlu0 1
    %113 = vperm.xlu0 %112, %v31
    %v114 = vpop.permute.xlu0 %113
    %v116 = vlaneseq
    %v117 = vshrl.u32 %v116, 7
    %v118 = vsub.s32 1, %v117
    %v119 = vrot.slane %v23, %v118
    %v120 = vmul.f32 %v86, %v119
    %v121 = vmul.f32 %v90, %v119
    %v122 = vmul.f32 %v94, %v119
    %v123 = vmul.f32 %v98, %v119
    %v124 = vmul.f32 %v102, %v119
    %v125 = vmul.f32 %v106, %v119
    %v126 = vmul.f32 %v110, %v119
    %v127 = vmul.f32 %v114, %v119
    %v128 = vadd.f32 %v76, %v120
    %v129 = vadd.f32 %v77, %v121
    %v130 = vadd.f32 %v78, %v122
    %v131 = vadd.f32 %v79, %v123
    %v132 = vadd.f32 %v80, %v124
    %v133 = vadd.f32 %v81, %v125
    %v134 = vadd.f32 %v82, %v126
    %v135 = vadd.f32 %v83, %v127
    %v136 = vld [vmem:[%s2] sm:$0xff]
    %v137 = vld [vmem:[%s2 + $0x8] sm:$0xff]
    %v138 = vld [vmem:[%s2 + $0x10] sm:$0xff]
    %v139 = vld [vmem:[%s2 + $0x18] sm:$0xff]
    %v140 = vld [vmem:[%s2 + $0x20] sm:$0xff]
    %v141 = vld [vmem:[%s2 + $0x28] sm:$0xff]
    %v142 = vld [vmem:[%s2 + $0x30] sm:$0xff]
    %v143 = vld [vmem:[%s2 + $0x38] sm:$0xff]
    %145 = vset.pattern.permute.xlu0 0
    %146 = vperm.xlu0 %145, %v136
    %v147 = vpop.permute.xlu0 %146
    %150 = vset.pattern.permute.xlu0 0
    %151 = vperm.xlu0 %150, %v137
    %v152 = vpop.permute.xlu0 %151
    %155 = vset.pattern.permute.xlu0 0
    %156 = vperm.xlu0 %155, %v138
    %v157 = vpop.permute.xlu0 %156
    %160 = vset.pattern.permute.xlu0 0
    %161 = vperm.xlu0 %160, %v139
    %v162 = vpop.permute.xlu0 %161
    %165 = vset.pattern.permute.xlu0 0
    %166 = vperm.xlu0 %165, %v140
    %v167 = vpop.permute.xlu0 %166
    %170 = vset.pattern.permute.xlu0 0
    %171 = vperm.xlu0 %170, %v141
    %v172 = vpop.permute.xlu0 %171
    %175 = vset.pattern.permute.xlu0 0
    %176 = vperm.xlu0 %175, %v142
    %v177 = vpop.permute.xlu0 %176
    %180 = vset.pattern.permute.xlu0 0
    %181 = vperm.xlu0 %180, %v143
    %v182 = vpop.permute.xlu0 %181
    %v184 = vadd.f32 %v128, %v147
    %v185 = vadd.f32 %v129, %v152
    %v186 = vadd.f32 %v130, %v157
    %v187 = vadd.f32 %v131, %v162
    %v188 = vadd.f32 %v132, %v167
    %v189 = vadd.f32 %v133, %v172
    %v190 = vadd.f32 %v134, %v177
    %v191 = vadd.f32 %v135, %v182
    %v192 = vmax.f32 %v184, 0.0
    %v193 = vmax.f32 %v185, 0.0
    %v194 = vmax.f32 %v186, 0.0
    %v195 = vmax.f32 %v187, 0.0
    %v196 = vmax.f32 %v188, 0.0
    %v197 = vmax.f32 %v189, 0.0
    %v198 = vmax.f32 %v190, 0.0
    %v199 = vmax.f32 %v191, 0.0
    %v200 = vld [vmem:[%s3] sm:$0xff]
    %v201 = vld [vmem:[%s3 + $0x8] sm:$0xff]
    %v202 = vld [vmem:[%s3 + $0x10] sm:$0xff]
    %v203 = vld [vmem:[%s3 + $0x18] sm:$0xff]
    %v204 = vld [vmem:[%s3 + $0x20] sm:$0xff]
    %v205 = vld [vmem:[%s3 + $0x28] sm:$0xff]
    %v206 = vld [vmem:[%s3 + $0x30] sm:$0xff]
    %v207 = vld [vmem:[%s3 + $0x38] sm:$0xff]
    %209 = vset.pattern.permute.xlu0 0
    %210 = vperm.xlu0 %209, %v200
    %v211 = vpop.permute.xlu0 %210
    %214 = vset.pattern.permute.xlu0 0
    %215 = vperm.xlu0 %214, %v201
    %v216 = vpop.permute.xlu0 %215
    %219 = vset.pattern.permute.xlu0 0
    %220 = vperm.xlu0 %219, %v202
    %v221 = vpop.permute.xlu0 %220
    %224 = vset.pattern.permute.xlu0 0
    %225 = vperm.xlu0 %224, %v203
    %v226 = vpop.permute.xlu0 %225
    %229 = vset.pattern.permute.xlu0 0
    %230 = vperm.xlu0 %229, %v204
    %v231 = vpop.permute.xlu0 %230
    %234 = vset.pattern.permute.xlu0 0
    %235 = vperm.xlu0 %234, %v205
    %v236 = vpop.permute.xlu0 %235
    %239 = vset.pattern.permute.xlu0 0
    %240 = vperm.xlu0 %239, %v206
    %v241 = vpop.permute.xlu0 %240
    %244 = vset.pattern.permute.xlu0 0
    %245 = vperm.xlu0 %244, %v207
    %v246 = vpop.permute.xlu0 %245
    %v248 = vmul.f32 %v192, %v211
    %v249 = vmul.f32 %v193, %v216
    %v250 = vmul.f32 %v194, %v221
    %v251 = vmul.f32 %v195, %v226
    %v252 = vmul.f32 %v196, %v231
    %v253 = vmul.f32 %v197, %v236
    %v254 = vmul.f32 %v198, %v241
    %v255 = vmul.f32 %v199, %v246
    %v256 = vadd.f32 %v248, %v249
    %v257 = vadd.f32 %v256, %v250
    %v258 = vadd.f32 %v257, %v251
    %v259 = vadd.f32 %v258, %v252
    %v260 = vadd.f32 %v259, %v253
    %v261 = vadd.f32 %v260, %v254
    %v262 = vadd.f32 %v261, %v255
    %v263 = vrot.slane %v262, 4
    %v264 = vadd.f32 %v262, %v263
    %v265 = vrot.slane %v264, 2
    %v266 = vadd.f32 %v264, %v265
    %v267 = vrot.slane %v266, 1
    %v268 = vadd.f32 %v266, %v267
    %v269 = vld [vmem:[#allocation2] sm:$0x1]
    %271 = vset.pattern.permute.xlu0 0
    %272 = vperm.xlu0 %271, %v269
    %v273 = vpop.permute.xlu0 %272
    %v275 = vlaneseq
    %v276 = vshrl.u32 %v275, 7
    %v277 = vsub.s32 0, %v276
    %v278 = vrot.slane %v273, %v277
    %v279 = vadd.f32 %v268, %v278
    %280 = vst [vmem:[#allocation3] sm:$0x1] %v279
    // Predicated region
    $region22: #{tpu_custom_call.1} parent=1 // pred_check
      _
    $region23: #{tpu_custom_call.1} parent=1 // pred_check_branch
      %282 = sbr.rel (0) target = $region25
    $region24: #{tpu_custom_call.1} parent=1 // pred_region
      %s284 = ssub.s32 16, 16
      %285 = vsyncadd [#allocation4], %s284
      %s287 = sshll.u32 [#allocation3], 4
      %s288 = int_to_ptr.vmem [resolvable:$true] %s287
      %290 = dma.vmem_to_hbm [thread:$0]  %s288, 16, %s5, [#allocation4]
    $region25: #{tpu_custom_call.1} parent=1 // pred_fallthru
      _
    // Predicated region
    $region26: #{tpu_custom_call.1} parent=1 // pred_check
      _
    $region27: #{tpu_custom_call.1} parent=1 // pred_check_branch
      %292 = sbr.rel (0) target = $region29
    $region28: #{tpu_custom_call.1} parent=1 // pred_region
      %293 = dma.done [#allocation4], 16
    $region29: #{tpu_custom_call.1} parent=1 // pred_fallthru
      _
    %294 = vsyncpa [#allocation4], 1

</llo_original>
